<compile_context>
chip_gen: v5e
topology: v5e:2x2
jax: 0.10.0
libtpu: 0.0.40
codegen_flags: <defaults>
</compile_context>

<pallas_src>
import jax
import jax.numpy as jnp
from jax.experimental import pallas as pl
from jax.experimental.pallas import tpu as pltpu


def _patch_embed_kernel(img_ref, w_ref, pos_ref, out_ref):
    # img_ref : (block_bs, M, P2)   flattened patches for block_bs images (M = C*Np)
    # w_ref   : (P2, D)             shared linear weight (already transposed)
    # pos_ref : (M, D)              pos-embedding body rows with the bias folded in
    # out_ref : (block_bs, M, D)
    w = w_ref[...]            # hoisted out of the unrolled loop
    pos = pos_ref[...]
    for b in range(out_ref.shape[0]):            # static unroll over batch sub-tile
        x = jnp.dot(img_ref[b], w, preferred_element_type=jnp.float32)   # (M, D)
        out_ref[b] = (x + pos).astype(out_ref.dtype)


def _pick_block_bs(bs, rows_per_image, target_rows=512):
    """Largest divisor of bs whose tile stays around `target_rows` GEMM rows."""
    best = 1
    for cand in range(1, bs + 1):
        if bs % cand == 0 and cand * rows_per_image <= max(target_rows, rows_per_image):
            best = cand
    return best


def image_embedding(image, weight_t, bias, cls_token, pos_embedding):
    """
    image        : (bs, C, Np, P2)   image already split into flattened patches
    weight_t     : (P2, D)           W.T of the nn.Linear(P2, D)
    bias         : (D,)
    cls_token    : (C, D)            from the (1, 1, C, D) parameter
    pos_embedding: (C, Np+1, D)      from the (1, Np+1, C, D) parameter (transposed)
    returns      : (bs, C, Np+1, D)  float32
    """
    bs, C, Np, P2 = image.shape
    D = weight_t.shape[1]
    M = C * Np                                    # rows per image in the collapsed GEMM

    # Fold the linear bias into the body rows of the positional embedding:
    # (x @ W + b) + pos == x @ W + (pos + b).  Done in f32 in the wrapper.
    pos_body = (pos_embedding[:, 1:, :].astype(jnp.float32)
                + bias.astype(jnp.float32)).reshape(M, D)

    # Collapse (C, Np) into one M axis so each grid step is one big matmul slab.
    img_flat = image.reshape(bs, M, P2)

    block_bs = _pick_block_bs(bs, M)
    grid = (bs // block_bs,)

    flops = 2 * bs * M * P2 * D
    bytes_accessed = 4 * (img_flat.size + weight_t.size + pos_body.size + bs * M * D)

    body = pl.pallas_call(
        _patch_embed_kernel,
        out_shape=jax.ShapeDtypeStruct((bs, M, D), jnp.float32),
        grid_spec=pltpu.PrefetchScalarGridSpec(
            num_scalar_prefetch=0,
            grid=grid,
            in_specs=[
                pl.BlockSpec((block_bs, M, P2), lambda i: (i, 0, 0)),
                pl.BlockSpec((P2, D), lambda i: (0, 0)),     # grid-invariant weight
                pl.BlockSpec((M, D), lambda i: (0, 0)),      # grid-invariant pos+bias
            ],
            out_specs=pl.BlockSpec((block_bs, M, D), lambda i: (i, 0, 0)),
        ),
        compiler_params=pltpu.CompilerParams(
            dimension_semantics=("parallel",)),
        cost_estimate=pl.CostEstimate(
            flops=flops, transcendentals=0, bytes_accessed=bytes_accessed),
    )(img_flat, weight_t, pos_body)

    # cls row is image-independent: build it once outside the kernel and prepend.
    cls_row = (cls_token.astype(jnp.float32)
               + pos_embedding[:, 0, :].astype(jnp.float32)).reshape(1, C, 1, D)
    cls = jnp.broadcast_to(cls_row, (bs, C, 1, D))
    return jnp.concatenate([cls, body.reshape(bs, C, Np, D)], axis=2)


def image_embedding_ref(image, weight_t, bias, cls_token, pos_embedding):
    """Pure-JAX reference matching the PyTorch forward."""
    bs, C, Np, P2 = image.shape
    D = weight_t.shape[1]
    x = jnp.einsum("bcnp,pd->bcnd", image, weight_t) + bias            # (bs,C,Np,D)
    cls = jnp.broadcast_to(cls_token.reshape(1, C, 1, D), (bs, C, 1, D))
    x = jnp.concatenate([cls, x], axis=-2)                             # (bs,C,Np+1,D)
    return x + pos_embedding.reshape(1, C, Np + 1, D)


if __name__ == "__main__":
    # Small, module-consistent shapes.
    imsize = 16
    patch_size = 4
    n_channels = 4
    D = 32
    bs = 2
    num_patches = imsize ** 2 // patch_size ** 2        # 16
    P2 = patch_size ** 2                                # 16

    key = jax.random.PRNGKey(0)
    k_img, k_w, k_b, k_cls, k_pos = jax.random.split(key, 5)

    image = jax.random.normal(k_img, (bs, n_channels, num_patches, P2), jnp.float32)
    # nn.Linear(P2, D): weight (D, P2), bias (D,) -- store transposed weight.
    weight = jax.random.normal(k_w, (D, P2), jnp.float32) * (1.0 / P2 ** 0.5)
    weight_t = weight.T                                                # (P2, D)
    bias = jax.random.normal(k_b, (D,), jnp.float32) * 0.01
    # cls_token parameter (1, 1, C, D) -> (C, D)
    cls_token = jax.random.normal(k_cls, (n_channels, D), jnp.float32)
    # pos_embedding parameter (1, Np+1, C, D) -> transposed to (C, Np+1, D)
    pos_embedding = jax.random.normal(
        k_pos, (n_channels, num_patches + 1, D), jnp.float32)

    out = image_embedding(image, weight_t, bias, cls_token, pos_embedding)
    out = jax.block_until_ready(out)

    ref = image_embedding_ref(image, weight_t, bias, cls_token, pos_embedding)
    assert out.shape == (bs, n_channels, num_patches + 1, D)
    assert jnp.allclose(out, ref, atol=1e-5, rtol=1e-5)

    print("KERNEL_OK")
</pallas_src>

<mosaic_0001>
module attributes {stable_mosaic.version = 11 : i64} {
  func.func @_patch_embed_kernel(%arg0: i32, %arg1: memref<2x64x16xf32, #tpu.memory_space<vmem>>, %arg2: memref<16x32xf32, #tpu.memory_space<vmem>>, %arg3: memref<64x32xf32, #tpu.memory_space<vmem>>, %arg4: memref<2x64x32xf32, #tpu.memory_space<vmem>>) attributes {dimension_semantics = [#tpu.dimension_semantics<parallel>], iteration_bounds = array<i64: 1>, scalar_prefetch = 0 : i64, scratch_operands = 0 : i64, tpu.core_type = #tpu.core_type<tc>, window_params = [{transform_indices = @transform_0, window_bounds = array<i64: 2, 64, 16>}, {pipeline_mode = #tpu.pipeline_mode<synchronous>, transform_indices = @transform_1, window_bounds = array<i64: 16, 32>}, {pipeline_mode = #tpu.pipeline_mode<synchronous>, transform_indices = @transform_2, window_bounds = array<i64: 64, 32>}, {transform_indices = @transform_3, window_bounds = array<i64: 2, 64, 32>}]} {
    %c0 = arith.constant 0 : index
    %c0_0 = arith.constant 0 : index
    %0 = vector.load %arg2[%c0, %c0_0] : memref<16x32xf32, #tpu.memory_space<vmem>>, vector<16x32xf32>
    %c0_1 = arith.constant 0 : index
    %c0_2 = arith.constant 0 : index
    %1 = vector.load %arg3[%c0_1, %c0_2] : memref<64x32xf32, #tpu.memory_space<vmem>>, vector<64x32xf32>
    %c0_3 = arith.constant 0 : index
    %c0_4 = arith.constant 0 : index
    %c0_5 = arith.constant 0 : index
    %2 = vector.load %arg1[%c0_3, %c0_4, %c0_5] : memref<2x64x16xf32, #tpu.memory_space<vmem>>, vector<1x64x16xf32>
    %3 = vector.shape_cast %2 : vector<1x64x16xf32> to vector<64x16xf32>
    %cst = arith.constant dense<0.000000e+00> : vector<64x32xf32>
    %4 = tpu.matmul %3, %0, %cst {dimension_numbers = #tpu.dot_dimension_numbers<[1], [0], [0], [1], [0, 0, 1, 1], [], []>} : vector<64x16xf32>, vector<16x32xf32>, vector<64x32xf32> -> vector<64x32xf32>
    %5 = arith.addf %4, %1 : vector<64x32xf32>
    %c0_6 = arith.constant 0 : index
    %c0_7 = arith.constant 0 : index
    %c0_8 = arith.constant 0 : index
    %6 = vector.load %arg4[%c0_6, %c0_7, %c0_8] : memref<2x64x32xf32, #tpu.memory_space<vmem>>, vector<1x64x32xf32>
    %7 = vector.shape_cast %6 : vector<1x64x32xf32> to vector<64x32xf32>
    %8 = vector.shape_cast %5 : vector<64x32xf32> to vector<1x64x32xf32>
    tpu.vector_store %arg4[%c0_6, %c0_7, %c0_8], %8 {strides = array<i32>} : memref<2x64x32xf32, #tpu.memory_space<vmem>>, vector<1x64x32xf32>,
    %c1 = arith.constant 1 : index
    %c0_9 = arith.constant 0 : index
    %c0_10 = arith.constant 0 : index
    %9 = vector.load %arg1[%c1, %c0_9, %c0_10] : memref<2x64x16xf32, #tpu.memory_space<vmem>>, vector<1x64x16xf32>
    %10 = vector.shape_cast %9 : vector<1x64x16xf32> to vector<64x16xf32>
    %cst_11 = arith.constant dense<0.000000e+00> : vector<64x32xf32>
    %11 = tpu.matmul %10, %0, %cst_11 {dimension_numbers = #tpu.dot_dimension_numbers<[1], [0], [0], [1], [0, 0, 1, 1], [], []>} : vector<64x16xf32>, vector<16x32xf32>, vector<64x32xf32> -> vector<64x32xf32>
    %12 = arith.addf %11, %1 : vector<64x32xf32>
    %c1_12 = arith.constant 1 : index
    %c0_13 = arith.constant 0 : index
    %c0_14 = arith.constant 0 : index
    %13 = vector.load %arg4[%c1_12, %c0_13, %c0_14] : memref<2x64x32xf32, #tpu.memory_space<vmem>>, vector<1x64x32xf32>
    %14 = vector.shape_cast %13 : vector<1x64x32xf32> to vector<64x32xf32>
    %15 = vector.shape_cast %12 : vector<64x32xf32> to vector<1x64x32xf32>
    tpu.vector_store %arg4[%c1_12, %c0_13, %c0_14], %15 {strides = array<i32>} : memref<2x64x32xf32, #tpu.memory_space<vmem>>, vector<1x64x32xf32>,
    return
  }
  func.func @transform_0(%arg0: i32) -> (i32, i32, i32) {
    %c0_i32 = arith.constant 0 : i32
    %c0_i32_0 = arith.constant 0 : i32
    %c0_i32_1 = arith.constant 0 : i32
    return %arg0, %c0_i32, %c0_i32_0 : i32, i32, i32
  }
  func.func @transform_1(%arg0: i32) -> (i32, i32) {
    %c0_i32 = arith.constant 0 : i32
    %c0_i32_0 = arith.constant 0 : i32
    %c0_i32_1 = arith.constant 0 : i32
    return %c0_i32, %c0_i32_0 : i32, i32
  }
  func.func @transform_2(%arg0: i32) -> (i32, i32) {
    %c0_i32 = arith.constant 0 : i32
    %c0_i32_0 = arith.constant 0 : i32
    %c0_i32_1 = arith.constant 0 : i32
    return %c0_i32, %c0_i32_0 : i32, i32
  }
  func.func @transform_3(%arg0: i32) -> (i32, i32, i32) {
    %c0_i32 = arith.constant 0 : i32
    %c0_i32_0 = arith.constant 0 : i32
    %c0_i32_1 = arith.constant 0 : i32
    return %arg0, %c0_i32, %c0_i32_0 : i32, i32, i32
  }
}

</mosaic_0001>

<llo_original>
// kernel: tpu_custom_call.1
$region0: #{tpu_custom_call.1}
  #allocation0 [shape = 'u32[]', space=smem, size = 0x4, offset = 0x4, fixed_abs, tag = 'smem constant byte address 0x4 - core index']
  #allocation1 [shape = 'u32[72,128]{1,0:T(1,128)}', space=vmem, size = 0x9000, scoped, tag = 'internal scratch']
  %s0 = inlined_call_operand.vmem [shape: f32[2,64,16], index: 0, kind: input, shape index: {}]
  %s1 = inlined_call_operand.vmem [shape: f32[16,32], index: 1, kind: input, shape index: {}]
  %s2 = inlined_call_operand.vmem [shape: f32[64,32], index: 2, kind: input, shape index: {}]
  %s3 = inlined_call_operand.vmem [shape: f32[2,64,32], index: 3, kind: output, shape index: {}]
  %s4 = sld [smem:[#allocation0]]
  $region22: #{tpu_custom_call.1} parent=0
    _
  %s6 = ssub.s32 1, %s4
  %s7 = scalar_select 0, %s6, %s4
  // Predicated region
  $region2: #{tpu_custom_call.1} parent=0 // pred_check
    _
  $region3: #{tpu_custom_call.1} parent=0 // pred_check_branch
    %9 = sbr.rel (0) target = $region5
  $region4: #{tpu_custom_call.1} parent=0 // pred_region
    _
  $region5: #{tpu_custom_call.1} parent=0 // pred_fallthru
    _
  // Predicated region
  $region6: #{tpu_custom_call.1} parent=0 // pred_check
    _
  $region7: #{tpu_custom_call.1} parent=0 // pred_check_branch
    %11 = sbr.rel (0) target = $region9
  $region8: #{tpu_custom_call.1} parent=0 // pred_region
    _
  $region9: #{tpu_custom_call.1} parent=0 // pred_fallthru
    _
  // Predicated region
  $region10: #{tpu_custom_call.1} parent=0 // pred_check
    _
  $region11: #{tpu_custom_call.1} parent=0 // pred_check_branch
    %13 = sbr.rel (0) target = $region13
  $region12: #{tpu_custom_call.1} parent=0 // pred_region
    _
  $region13: #{tpu_custom_call.1} parent=0 // pred_fallthru
    _
  %v14 = vld [vmem:[%s1] sm:$0xff]
  %v15 = vld [vmem:[%s1 + $0x8] sm:$0xff]
  %v16 = vld [vmem:[%s2] sm:$0xff]
  %v17 = vld [vmem:[%s2 + $0x8] sm:$0xff]
  %v18 = vld [vmem:[%s2 + $0x10] sm:$0xff]
  %v19 = vld [vmem:[%s2 + $0x18] sm:$0xff]
  %v20 = vld [vmem:[%s2 + $0x20] sm:$0xff]
  %v21 = vld [vmem:[%s2 + $0x28] sm:$0xff]
  %v22 = vld [vmem:[%s2 + $0x30] sm:$0xff]
  %v23 = vld [vmem:[%s2 + $0x38] sm:$0xff]
  %v24 = vld [vmem:[%s0] sm:$0xff]
  %v25 = vld [vmem:[%s0 + $0x8] sm:$0xff]
  %v26 = vld [vmem:[%s0 + $0x10] sm:$0xff]
  %v27 = vld [vmem:[%s0 + $0x18] sm:$0xff]
  %v28 = vld [vmem:[%s0 + $0x20] sm:$0xff]
  %v29 = vld [vmem:[%s0 + $0x28] sm:$0xff]
  %v30 = vld [vmem:[%s0 + $0x30] sm:$0xff]
  %v31 = vld [vmem:[%s0 + $0x38] sm:$0xff]
  %vm32 = vcmask 130048
  %v34 = vsel %vm32, %v24, 0
  %v37 = vsel %vm32, %v25, 0
  %v40 = vsel %vm32, %v26, 0
  %v43 = vsel %vm32, %v27, 0
  %v46 = vsel %vm32, %v28, 0
  %v49 = vsel %vm32, %v29, 0
  %v52 = vsel %vm32, %v30, 0
  %v55 = vsel %vm32, %v31, 0
  %57 = vmatpush.msra.mxu0 0.0
  %58 = vmatpush.msra.mxu0 0.0
  %59 = vmatpush.msra.mxu0 0.0
  %60 = vmatpush.msra.mxu0 0.0
  %61 = vmatpush.msra.mxu0 0.0
  %62 = vmatpush.msra.mxu0 0.0
  %63 = vmatpush.msra.mxu0 0.0
  %64 = vmatpush.msra.mxu0 0.0
  %65 = vmatpush.msra.mxu0 0.0
  %66 = vmatpush.msra.mxu0 0.0
  %67 = vmatpush.msra.mxu0 0.0
  %68 = vmatpush.msra.mxu0 0.0
  %69 = vmatpush.msra.mxu0 0.0
  %70 = vmatpush.msra.mxu0 0.0
  %71 = vmatpush.msra.mxu0 %v15
  %72 = vmatpush.msra.mxu0 %v14
  %73 = vmatmul.f32.gmra.mxu0 %v34
  %v74 = vpop.f32.mrf.mxu0
  %v75 = vadd.f32 %v16, %v74
  %76 = vmatmul.f32.gmra.mxu0 %v37
  %v77 = vpop.f32.mrf.mxu0
  %v78 = vadd.f32 %v17, %v77
  %79 = vmatmul.f32.gmra.mxu0 %v40
  %v80 = vpop.f32.mrf.mxu0
  %v81 = vadd.f32 %v18, %v80
  %82 = vmatmul.f32.gmra.mxu0 %v43
  %v83 = vpop.f32.mrf.mxu0
  %v84 = vadd.f32 %v19, %v83
  %85 = vmatmul.f32.gmra.mxu0 %v46
  %v86 = vpop.f32.mrf.mxu0
  %v87 = vadd.f32 %v20, %v86
  %88 = vmatmul.f32.gmra.mxu0 %v49
  %v89 = vpop.f32.mrf.mxu0
  %v90 = vadd.f32 %v21, %v89
  %91 = vmatmul.f32.gmra.mxu0 %v52
  %v92 = vpop.f32.mrf.mxu0
  %v93 = vadd.f32 %v22, %v92
  %94 = vmatmul.f32.gmra.mxu0 %v55
  %v95 = vpop.f32.mrf.mxu0
  %v96 = vadd.f32 %v23, %v95
  %97 = vdwg.mxu0
  %vm98 = vcmask 261120
  %99 = vst.msk [vmem:[%s3] sm:$0xff] %vm98, %v75
  %100 = vst.msk [vmem:[%s3 + $0x8] sm:$0xff] %vm98, %v78
  %101 = vst.msk [vmem:[%s3 + $0x10] sm:$0xff] %vm98, %v81
  %102 = vst.msk [vmem:[%s3 + $0x18] sm:$0xff] %vm98, %v84
  %103 = vst.msk [vmem:[%s3 + $0x20] sm:$0xff] %vm98, %v87
  %104 = vst.msk [vmem:[%s3 + $0x28] sm:$0xff] %vm98, %v90
  %105 = vst.msk [vmem:[%s3 + $0x30] sm:$0xff] %vm98, %v93
  %106 = vst.msk [vmem:[%s3 + $0x38] sm:$0xff] %vm98, %v96
  %s107 = scalar_lea.vmem %s0, 64
  %v108 = vld [vmem:[%s107] sm:$0xff]
  %v109 = vld [vmem:[%s107 + $0x8] sm:$0xff]
  %v110 = vld [vmem:[%s107 + $0x10] sm:$0xff]
  %v111 = vld [vmem:[%s107 + $0x18] sm:$0xff]
  %v112 = vld [vmem:[%s107 + $0x20] sm:$0xff]
  %v113 = vld [vmem:[%s107 + $0x28] sm:$0xff]
  %v114 = vld [vmem:[%s107 + $0x30] sm:$0xff]
  %v115 = vld [vmem:[%s107 + $0x38] sm:$0xff]
  %v117 = vsel %vm32, %v108, 0
  %v120 = vsel %vm32, %v109, 0
  %v123 = vsel %vm32, %v110, 0
  %v126 = vsel %vm32, %v111, 0
  %v129 = vsel %vm32, %v112, 0
  %v132 = vsel %vm32, %v113, 0
  %v135 = vsel %vm32, %v114, 0
  %v138 = vsel %vm32, %v115, 0
  %140 = vmatpush.msra.mxu0 0.0
  %141 = vmatpush.msra.mxu0 0.0
  %142 = vmatpush.msra.mxu0 0.0
  %143 = vmatpush.msra.mxu0 0.0
  %144 = vmatpush.msra.mxu0 0.0
  %145 = vmatpush.msra.mxu0 0.0
  %146 = vmatpush.msra.mxu0 0.0
  %147 = vmatpush.msra.mxu0 0.0
  %148 = vmatpush.msra.mxu0 0.0
  %149 = vmatpush.msra.mxu0 0.0
  %150 = vmatpush.msra.mxu0 0.0
  %151 = vmatpush.msra.mxu0 0.0
  %152 = vmatpush.msra.mxu0 0.0
  %153 = vmatpush.msra.mxu0 0.0
  %154 = vmatpush.msra.mxu0 %v15
  %155 = vmatpush.msra.mxu0 %v14
  %156 = vmatmul.f32.gmra.mxu0 %v117
  %v157 = vpop.f32.mrf.mxu0
  %v158 = vadd.f32 %v16, %v157
  %159 = vmatmul.f32.gmra.mxu0 %v120
  %v160 = vpop.f32.mrf.mxu0
  %v161 = vadd.f32 %v17, %v160
  %162 = vmatmul.f32.gmra.mxu0 %v123
  %v163 = vpop.f32.mrf.mxu0
  %v164 = vadd.f32 %v18, %v163
  %165 = vmatmul.f32.gmra.mxu0 %v126
  %v166 = vpop.f32.mrf.mxu0
  %v167 = vadd.f32 %v19, %v166
  %168 = vmatmul.f32.gmra.mxu0 %v129
  %v169 = vpop.f32.mrf.mxu0
  %v170 = vadd.f32 %v20, %v169
  %171 = vmatmul.f32.gmra.mxu0 %v132
  %v172 = vpop.f32.mrf.mxu0
  %v173 = vadd.f32 %v21, %v172
  %174 = vmatmul.f32.gmra.mxu0 %v135
  %v175 = vpop.f32.mrf.mxu0
  %v176 = vadd.f32 %v22, %v175
  %177 = vmatmul.f32.gmra.mxu0 %v138
  %v178 = vpop.f32.mrf.mxu0
  %v179 = vadd.f32 %v23, %v178
  %180 = vdwg.mxu0
  %s181 = scalar_lea.vmem %s3, 64
  %182 = vst.msk [vmem:[%s181] sm:$0xff] %vm98, %v158
  %183 = vst.msk [vmem:[%s181 + $0x8] sm:$0xff] %vm98, %v161
  %184 = vst.msk [vmem:[%s181 + $0x10] sm:$0xff] %vm98, %v164
  %185 = vst.msk [vmem:[%s181 + $0x18] sm:$0xff] %vm98, %v167
  %186 = vst.msk [vmem:[%s181 + $0x20] sm:$0xff] %vm98, %v170
  %187 = vst.msk [vmem:[%s181 + $0x28] sm:$0xff] %vm98, %v173
  %188 = vst.msk [vmem:[%s181 + $0x30] sm:$0xff] %vm98, %v176
  %189 = vst.msk [vmem:[%s181 + $0x38] sm:$0xff] %vm98, %v179
  // Predicated region
  $region14: #{tpu_custom_call.1} parent=0 // pred_check
    _
  $region15: #{tpu_custom_call.1} parent=0 // pred_check_branch
    %191 = sbr.rel (0) target = $region17
  $region16: #{tpu_custom_call.1} parent=0 // pred_region
    _
  $region17: #{tpu_custom_call.1} parent=0 // pred_fallthru
    _
  // Predicated region
  $region18: #{tpu_custom_call.1} parent=0 // pred_check
    _
  $region19: #{tpu_custom_call.1} parent=0 // pred_check_branch
    %193 = sbr.rel (0) target = $region21
  $region20: #{tpu_custom_call.1} parent=0 // pred_region
    _
  $region21: #{tpu_custom_call.1} parent=0 // pred_fallthru
    _

</llo_original>
